<compile_context>
chip_gen: v7x
topology: tpu7x:2x2x1
jax: 0.10.0
libtpu: 0.0.40
codegen_flags: <defaults>
</compile_context>

<pallas_src>
import jax
import jax.numpy as jnp
from jax.experimental import pallas as pl
from jax.experimental.pallas import tpu as pltpu

IN_FEATURES = 3
OUT_FEATURES = 8

K_PAD = 8     # weight rows padded to one full sublane group (one vreg)
N_PAD = 128   # out_features padded to lane width


def _linear_leaky_kernel(x_ref, w_ref, o_ref):
    # x_ref: VMEM (B, IN_FEATURES) f32
    # w_ref: VMEM (K_PAD, N_PAD)   f32   (row k = k-th input-feature's weights)
    # o_ref: VMEM (B, N_PAD)       f32
    x = x_ref[...]                       # (B, 3)
    w = w_ref[...]                       # (8, 128)

    # Full-tile linear: 3 broadcast FMAs -> (B, N_PAD).
    #   (B,1) lane-broadcast  x  (1,N_PAD) sublane-broadcast
    acc = x[:, 0:1] * w[0:1, :]
    for k in range(1, IN_FEATURES):      # static unroll (2 more FMAs)
        acc = acc + x[:, k:k + 1] * w[k:k + 1, :]

    # torch.where(v1 > 0, v1, v1 * 0.1)
    o_ref[...] = jnp.where(acc > 0.0, acc, acc * 0.1)


def make_padded_weight(weight):
    """PyTorch Linear weight (out_features, in_features) -> padded (K_PAD, N_PAD).

    Called once at init; keeps the transpose + zero-fill out of the hot path."""
    w_t = weight.astype(jnp.float32).T            # (in_features, out_features)
    return (jnp.zeros((K_PAD, N_PAD), jnp.float32)
            .at[:IN_FEATURES, :OUT_FEATURES].set(w_t))


@jax.jit
def linear_leaky(x, w_pad):
    """x: (B, 3) f32, w_pad: (K_PAD, N_PAD) from make_padded_weight.

    Returns (B, 8) f32 = leaky_relu_0.1(x @ W^T)."""
    B = x.shape[0]

    out_pad = pl.pallas_call(
        _linear_leaky_kernel,
        out_shape=jax.ShapeDtypeStruct((B, N_PAD), jnp.float32),
        in_specs=[
            pl.BlockSpec(memory_space=pltpu.MemorySpace.VMEM),  # x (B, 3)
            pl.BlockSpec(memory_space=pltpu.MemorySpace.VMEM),  # weight tile
        ],
        out_specs=pl.BlockSpec(memory_space=pltpu.MemorySpace.VMEM),
    )(x.astype(jnp.float32), w_pad)

    # Exact module output shape; downstream consumers could take the padded
    # (B, 128) tile directly to avoid this micro-op.
    return out_pad[:, :OUT_FEATURES]


if __name__ == "__main__":
    key = jax.random.PRNGKey(0)
    kx, kw = jax.random.split(key)

    # Deterministic "parameters" and input matching the module shapes.
    x1 = jax.random.normal(kx, (1, IN_FEATURES), dtype=jnp.float32)
    # nn.Linear weight shape: (out_features, in_features) = (8, 3)
    bound = 1.0 / (IN_FEATURES ** 0.5)
    weight = jax.random.uniform(
        kw, (OUT_FEATURES, IN_FEATURES), dtype=jnp.float32,
        minval=-bound, maxval=bound)

    # Weight prep happens once, outside the per-call path.
    w_pad = make_padded_weight(weight)

    out = linear_leaky(x1, w_pad)
    jax.block_until_ready(out)

    # Sanity check against pure-JAX reference (this plain-XLA path is also the
    # recommended baseline for this 24-FLOP shape).
    ref = x1 @ weight.T
    ref = jnp.where(ref > 0, ref, ref * 0.1)
    assert out.shape == (1, OUT_FEATURES)
    assert jnp.allclose(out, ref, atol=1e-5, rtol=1e-5)

    print("KERNEL_OK")
</pallas_src>

<mosaic_0001>
module attributes {stable_mosaic.version = 11 : i64} {
  func.func @_linear_leaky_kernel(%arg0: memref<1x3xf32, #tpu.memory_space<vmem>>, %arg1: memref<8x128xf32, #tpu.memory_space<vmem>>, %arg2: memref<1x128xf32, #tpu.memory_space<vmem>>) attributes {dimension_semantics = [], scalar_prefetch = 0 : i64, scratch_operands = 0 : i64, tpu.core_type = #tpu.core_type<tc>} {
    %c0 = arith.constant 0 : index
    %c0_0 = arith.constant 0 : index
    %0 = vector.load %arg0[%c0, %c0_0] : memref<1x3xf32, #tpu.memory_space<vmem>>, vector<1x3xf32>
    %c0_1 = arith.constant 0 : index
    %c0_2 = arith.constant 0 : index
    %1 = vector.load %arg1[%c0_1, %c0_2] : memref<8x128xf32, #tpu.memory_space<vmem>>, vector<8x128xf32>
    %2 = vector.extract_strided_slice %0 {offsets = [0, 0], sizes = [1, 1], strides = [1, 1]} : vector<1x3xf32> to vector<1x1xf32>
    %3 = vector.extract_strided_slice %1 {offsets = [0, 0], sizes = [1, 128], strides = [1, 1]} : vector<8x128xf32> to vector<1x128xf32>
    %4 = vector.broadcast %2 : vector<1x1xf32> to vector<1x128xf32>
    %5 = arith.mulf %4, %3 : vector<1x128xf32>
    %6 = vector.extract_strided_slice %0 {offsets = [0, 1], sizes = [1, 1], strides = [1, 1]} : vector<1x3xf32> to vector<1x1xf32>
    %7 = vector.extract_strided_slice %1 {offsets = [1, 0], sizes = [1, 128], strides = [1, 1]} : vector<8x128xf32> to vector<1x128xf32>
    %8 = vector.broadcast %6 : vector<1x1xf32> to vector<1x128xf32>
    %9 = arith.mulf %8, %7 : vector<1x128xf32>
    %10 = arith.addf %5, %9 : vector<1x128xf32>
    %11 = vector.extract_strided_slice %0 {offsets = [0, 2], sizes = [1, 1], strides = [1, 1]} : vector<1x3xf32> to vector<1x1xf32>
    %12 = vector.extract_strided_slice %1 {offsets = [2, 0], sizes = [1, 128], strides = [1, 1]} : vector<8x128xf32> to vector<1x128xf32>
    %13 = vector.broadcast %11 : vector<1x1xf32> to vector<1x128xf32>
    %14 = arith.mulf %13, %12 : vector<1x128xf32>
    %15 = arith.addf %10, %14 : vector<1x128xf32>
    %cst = arith.constant 0.000000e+00 : f32
    %16 = vector.broadcast %cst : f32 to vector<1x128xf32>
    %17 = arith.cmpf ogt, %15, %16 : vector<1x128xf32>
    %cst_3 = arith.constant 1.000000e-01 : f32
    %18 = vector.broadcast %cst_3 : f32 to vector<1x128xf32>
    %19 = arith.mulf %15, %18 : vector<1x128xf32>
    %20 = arith.select %17, %15, %19 : vector<1x128xi1>, vector<1x128xf32>
    %c0_4 = arith.constant 0 : index
    %c0_5 = arith.constant 0 : index
    %21 = vector.load %arg2[%c0_4, %c0_5] : memref<1x128xf32, #tpu.memory_space<vmem>>, vector<1x128xf32>
    tpu.vector_store %arg2[%c0_4, %c0_5], %20 {strides = array<i32>} : memref<1x128xf32, #tpu.memory_space<vmem>>, vector<1x128xf32>,
    return
  }
}

</mosaic_0001>

<llo_original>
// kernel: linear_leaky.1
$region0: #{linear_leaky.1}
  #allocation0 [shape = 'u32[]', space=smem, size = 0x4, offset = 0x4, fixed_abs, tag = 'smem constant byte address 0x4 - core index']
  #allocation1 [shape = 'u32[144,128]{1,0:T(1,128)}', space=vmem, size = 0x12000, scoped, tag = 'internal scratch']
  %s0 = inlined_call_operand.hbm [shape: f32[1,3], index: 0, kind: input, shape index: {}]
  %s1 = inlined_call_operand.hbm [shape: f32[8,128], index: 1, kind: input, shape index: {}]
  %s2 = inlined_call_operand.hbm [shape: f32[1,128], index: 2, kind: output, shape index: {}]
  %s3 = sld [smem:[#allocation0]]
  $region26: #{linear_leaky.1} parent=0
    _
  %s5 = ssub.s32 1, %s3
  %s6 = scalar_select 0, %s5, %s3
  $region1: #{linear_leaky.1} parent=0
    #allocation2 [shape = 'u8[512]{0}', space=vmem, size = 0x400, scoped, tag = 'input window, operand 0, single buffered']
    #allocation3 [shape = 's32[1]{0}', space=sflag, size = 0x4, scoped, tag = 'scoped memory for linear_leaky.1']
    #allocation4 [shape = 's32[1]{0}', space=sflag, size = 0x4, scoped, tag = 'scoped memory for linear_leaky.1']
    #allocation5 [shape = 'u8[4096]{0}', space=vmem, size = 0x1000, scoped, tag = 'input window, operand 1, single buffered']
    #allocation6 [shape = 's32[1]{0}', space=sflag, size = 0x4, scoped, tag = 'scoped memory for linear_leaky.1']
    #allocation7 [shape = 'u8[512]{0}', space=vmem, size = 0x400, scoped, tag = 'output window, operand 0, single buffered']
    %7 = vsyncpa [#allocation3], 0
    %8 = vsyncpa [#allocation6], 0
    %9 = vsyncpa [#allocation4], 0
    // Predicated region
    $region2: #{linear_leaky.1} parent=1 // pred_check
      _
    $region3: #{linear_leaky.1} parent=1 // pred_check_branch
      %11 = sbr.rel (0) target = $region5
    $region4: #{linear_leaky.1} parent=1 // pred_region
      %s13 = ssub.s32 16, 16
      %14 = vsyncadd [#allocation3], %s13
      %s16 = sshll.u32 [#allocation2], 4
      %s17 = int_to_ptr.vmem [resolvable:$true] %s16
      %19 = dma.hbm_to_vmem [thread:$0]  %s0, 16, %s17, [#allocation3]
    $region5: #{linear_leaky.1} parent=1 // pred_fallthru
      _
    // Predicated region
    $region6: #{linear_leaky.1} parent=1 // pred_check
      _
    $region7: #{linear_leaky.1} parent=1 // pred_check_branch
      %21 = sbr.rel (0) target = $region9
    $region8: #{linear_leaky.1} parent=1 // pred_region
      %s23 = ssub.s32 128, 128
      %24 = vsyncadd [#allocation6], %s23
      %s26 = sshll.u32 [#allocation5], 4
      %s27 = int_to_ptr.vmem [resolvable:$true] %s26
      %29 = dma.hbm_to_vmem [thread:$0]  %s1, 128, %s27, [#allocation6]
    $region9: #{linear_leaky.1} parent=1 // pred_fallthru
      _
    // Predicated region
    $region10: #{linear_leaky.1} parent=1 // pred_check
      _
    $region11: #{linear_leaky.1} parent=1 // pred_check_branch
      %31 = sbr.rel (0) target = $region13
    $region12: #{linear_leaky.1} parent=1 // pred_region
      %32 = dma.done [#allocation3], 16
    $region13: #{linear_leaky.1} parent=1 // pred_fallthru
      _
    // Predicated region
    $region14: #{linear_leaky.1} parent=1 // pred_check
      _
    $region15: #{linear_leaky.1} parent=1 // pred_check_branch
      %34 = sbr.rel (0) target = $region17
    $region16: #{linear_leaky.1} parent=1 // pred_region
      %35 = dma.done [#allocation6], 128
    $region17: #{linear_leaky.1} parent=1 // pred_fallthru
      _
    %v36 = vld [vmem:[#allocation2] sm:$0x1]
    %v37 = vld [vmem:[#allocation5] sm:$0xff]
    %39 = vset.pattern.permute.xlu0 0
    %40 = vperm.xlu0 %39, %v36
    %v41 = vpop.permute.xlu0 %40
    %v43 = vlaneseq
    %v44 = vshrl.u32 %v43, 7
    %v45 = vsub.s32 0, %v44
    %v46 = vrot.slane %v41, %v45
    %v47 = vmul.f32 %v46, %v37
    %48 = vset.pattern.permute.xlu0 1
    %49 = vperm.xlu0 %48, %v36
    %v50 = vpop.permute.xlu0 %49
    %v52 = vlaneseq
    %v53 = vshrl.u32 %v52, 7
    %v54 = vsub.s32 0, %v53
    %v55 = vrot.slane %v50, %v54
    %v56 = vmul.f32 %v55, %v37
    %v58 = vrot.slane %v56, 1
    %v60 = vadd.f32 %v47, %v58
    %61 = vset.pattern.permute.xlu0 2
    %62 = vperm.xlu0 %61, %v36
    %v63 = vpop.permute.xlu0 %62
    %v65 = vlaneseq
    %v66 = vshrl.u32 %v65, 7
    %v67 = vsub.s32 0, %v66
    %v68 = vrot.slane %v63, %v67
    %v69 = vmul.f32 %v68, %v37
    %v71 = vrot.slane %v69, 2
    %v73 = vadd.f32 %v60, %v71
    %vm74 = vcmp.gt.f32.partialorder %v73, 0.0
    %v75 = vmul.f32 %v73, 0.1
    %v76 = vsel %vm74, %v73, %v75
    %77 = vst [vmem:[#allocation7] sm:$0x1] %v76
    // Predicated region
    $region18: #{linear_leaky.1} parent=1 // pred_check
      _
    $region19: #{linear_leaky.1} parent=1 // pred_check_branch
      %79 = sbr.rel (0) target = $region21
    $region20: #{linear_leaky.1} parent=1 // pred_region
      %s81 = ssub.s32 16, 16
      %82 = vsyncadd [#allocation4], %s81
      %s84 = sshll.u32 [#allocation7], 4
      %s85 = int_to_ptr.vmem [resolvable:$true] %s84
      %87 = dma.vmem_to_hbm [thread:$0]  %s85, 16, %s2, [#allocation4]
    $region21: #{linear_leaky.1} parent=1 // pred_fallthru
      _
    // Predicated region
    $region22: #{linear_leaky.1} parent=1 // pred_check
      _
    $region23: #{linear_leaky.1} parent=1 // pred_check_branch
      %89 = sbr.rel (0) target = $region25
    $region24: #{linear_leaky.1} parent=1 // pred_region
      %90 = dma.done [#allocation4], 16
    $region25: #{linear_leaky.1} parent=1 // pred_fallthru
      _
    %91 = vsyncpa [#allocation3], 1
    %92 = vsyncpa [#allocation6], 1
    %93 = vsyncpa [#allocation4], 1

</llo_original>
